<compile_context>
chip_gen: v7x
topology: tpu7x:2x2x1
jax: 0.10.0
libtpu: 0.0.40
codegen_flags: <defaults>
</compile_context>

<pallas_src>
import jax
import jax.numpy as jnp
from jax.experimental import pallas as pl
from jax.experimental.pallas import tpu as pltpu

_LANE = 128
_MAX_TILE = 512  # rows per batch tile (review: 512 hits ~85% of HBM roofline)


def _round_up(x, m):
    return ((x + m - 1) // m) * m


def _cdiv(a, b):
    return -(-a // b)


def _choose_batch_tile(B):
    """Batch tile: multiple of 16 (bf16 sublane pairs), <= _MAX_TILE rows.

    B <= _MAX_TILE -> single grid step with the whole batch.
    Larger B      -> split into an even number of steps (v7x 2-TC balance).
    """
    tb = _round_up(B, 16)
    if tb <= _MAX_TILE:
        return tb
    n_steps = _cdiv(B, _MAX_TILE)
    if n_steps % 2:
        n_steps += 1  # even grid so the parallel axis splits evenly on v7x
    return _round_up(_cdiv(B, n_steps), 16)


def _actor_kernel(x_ref,
                  w1_ref, b1_ref,
                  w2_ref, b2_ref,
                  w3_ref, b3_ref,
                  w4_ref, b4_ref,
                  out_ref):
    """Fused 4-layer MLP: (matmul + bias + relu) x3 -> matmul + bias + tanh."""
    x = x_ref[...]

    h = jnp.dot(x.astype(jnp.bfloat16), w1_ref[...],
                preferred_element_type=jnp.float32) + b1_ref[...]
    h = jnp.maximum(h, 0.0)

    h = jnp.dot(h.astype(jnp.bfloat16), w2_ref[...],
                preferred_element_type=jnp.float32) + b2_ref[...]
    h = jnp.maximum(h, 0.0)

    h = jnp.dot(h.astype(jnp.bfloat16), w3_ref[...],
                preferred_element_type=jnp.float32) + b3_ref[...]
    h = jnp.maximum(h, 0.0)

    h = jnp.dot(h.astype(jnp.bfloat16), w4_ref[...],
                preferred_element_type=jnp.float32) + b4_ref[...]
    out_ref[...] = jnp.tanh(h).astype(out_ref.dtype)


def prepare_actor_params(params):
    """One-time param prep: bf16 weights, f32 biases, pad the 64-wide hidden.

    Zero-padding h3 (64 -> 128 lanes) is exact: padded h3 columns are
    relu(0) = 0 and the corresponding (zero-padded) w4 rows contribute 0.
    The w4 output dim stays at the true action_dim (narrow output store).
    """
    w3, w4 = params["w3"], params["w4"]
    h3_pad = _round_up(w3.shape[1], _LANE)  # 64 -> 128

    def pad_to(a, shape):
        return jnp.pad(a, [(0, s - d) for d, s in zip(a.shape, shape)])

    return {
        "w1": params["w1"].astype(jnp.bfloat16),
        "b1": params["b1"].astype(jnp.float32),
        "w2": params["w2"].astype(jnp.bfloat16),
        "b2": params["b2"].astype(jnp.float32),
        "w3": pad_to(w3, (w3.shape[0], h3_pad)).astype(jnp.bfloat16),
        "b3": pad_to(params["b3"], (1, h3_pad)).astype(jnp.float32),
        "w4": pad_to(w4, (h3_pad, w4.shape[1])).astype(jnp.bfloat16),
        "b4": params["b4"].astype(jnp.float32),
    }


@jax.jit
def _actor_forward_impl(state, w1, b1, w2, b2, w3, b3, w4, b4):
    B, state_dim = state.shape
    action_dim = w4.shape[1]

    tb = _choose_batch_tile(B)
    grid = (_cdiv(B, tb),)  # partial last block handled by Pallas; no jnp.pad

    def batch_map(i):
        return (i, 0)

    def const_map(i):  # weights/biases stay VMEM-resident across grid steps
        return (0, 0)

    in_specs = [
        pl.BlockSpec((tb, state_dim), batch_map),
        pl.BlockSpec(w1.shape, const_map),
        pl.BlockSpec(b1.shape, const_map),
        pl.BlockSpec(w2.shape, const_map),
        pl.BlockSpec(b2.shape, const_map),
        pl.BlockSpec(w3.shape, const_map),
        pl.BlockSpec(b3.shape, const_map),
        pl.BlockSpec(w4.shape, const_map),
        pl.BlockSpec(b4.shape, const_map),
    ]
    out_spec = pl.BlockSpec((tb, action_dim), batch_map)

    # Advisory cost hint: lets XLA overlap surrounding ops with this tiny call.
    flops = 2 * B * (w1.shape[0] * w1.shape[1] + w2.shape[0] * w2.shape[1]
                     + w3.shape[0] * w3.shape[1] + w4.shape[0] * w4.shape[1])
    weight_bytes = sum(int(a.size) * a.dtype.itemsize
                       for a in (w1, b1, w2, b2, w3, b3, w4, b4))
    cost = pl.CostEstimate(
        flops=flops,
        transcendentals=B * action_dim,
        bytes_accessed=B * (state_dim + action_dim) * 4 + weight_bytes,
    )

    return pl.pallas_call(
        _actor_kernel,
        out_shape=jax.ShapeDtypeStruct((B, action_dim), jnp.float32),
        grid=grid,
        in_specs=in_specs,
        out_specs=out_spec,
        compiler_params=pltpu.CompilerParams(
            dimension_semantics=("parallel",)),
        cost_estimate=cost,
    )(state, w1, b1, w2, b2, w3, b3, w4, b4)


def actor_forward(state, prepared):
    """Run the fused Actor MLP kernel on `state` (B, state_dim) float32."""
    return _actor_forward_impl(
        state,
        prepared["w1"], prepared["b1"],
        prepared["w2"], prepared["b2"],
        prepared["w3"], prepared["b3"],
        prepared["w4"], prepared["b4"],
    )


def init_actor_params(key, state_dim, action_dim):
    """Deterministic init mimicking PyTorch nn.Linear default (U[-1/sqrt(fan_in), +])."""
    dims = [(state_dim, 256), (256, 128), (128, 64), (64, action_dim)]
    params = {}
    for i, (fan_in, fan_out) in enumerate(dims, start=1):
        key, kw, kb = jax.random.split(key, 3)
        bound = 1.0 / jnp.sqrt(jnp.float32(fan_in))
        params[f"w{i}"] = jax.random.uniform(
            kw, (fan_in, fan_out), jnp.float32, minval=-bound, maxval=bound)
        params[f"b{i}"] = jax.random.uniform(
            kb, (1, fan_out), jnp.float32, minval=-bound, maxval=bound)
    return params


def actor_reference_f32(state, params):
    """Pure-JAX f32 reference of the same forward pass."""
    x = jnp.maximum(state @ params["w1"] + params["b1"], 0.0)
    x = jnp.maximum(x @ params["w2"] + params["b2"], 0.0)
    x = jnp.maximum(x @ params["w3"] + params["b3"], 0.0)
    return jnp.tanh(x @ params["w4"] + params["b4"])


def actor_reference_bf16(state, params):
    """Pure-JAX reference mirroring the kernel's bf16-in / f32-accumulate math."""
    def layer(x, w, b):
        return jnp.dot(x.astype(jnp.bfloat16), w.astype(jnp.bfloat16),
                       preferred_element_type=jnp.float32) + b
    x = jnp.maximum(layer(state, params["w1"], params["b1"]), 0.0)
    x = jnp.maximum(layer(x, params["w2"], params["b2"]), 0.0)
    x = jnp.maximum(layer(x, params["w3"], params["b3"]), 0.0)
    return jnp.tanh(layer(x, params["w4"], params["b4"]))


if __name__ == "__main__":
    key = jax.random.PRNGKey(0)
    B, state_dim, action_dim = 8, 32, 4

    key, k_state = jax.random.split(key)
    state = jax.random.normal(k_state, (B, state_dim), jnp.float32)
    params = init_actor_params(key, state_dim, action_dim)
    prepared = prepare_actor_params(params)

    # Small-batch (rollout-sized) call: grid=1, partial block (8 rows in a
    # 16-row tile).
    out = jax.block_until_ready(actor_forward(state, prepared))
    assert out.shape == (B, action_dim), out.shape
    assert jnp.allclose(out, actor_reference_bf16(state, params),
                        atol=1e-3, rtol=1e-3), "mismatch vs bf16 reference"
    assert jnp.allclose(out, actor_reference_f32(state, params),
                        atol=5e-2, rtol=5e-2), "mismatch vs f32 reference"

    # Replay-buffer-sized batch: grid=1, tile=304, no wrapper pad/slice.
    key, k_mid = jax.random.split(key)
    mid_state = jax.random.normal(k_mid, (300, state_dim), jnp.float32)
    mid_out = jax.block_until_ready(actor_forward(mid_state, prepared))
    assert mid_out.shape == (300, action_dim), mid_out.shape
    assert jnp.allclose(mid_out, actor_reference_bf16(mid_state, params),
                        atol=1e-3, rtol=1e-3), "mid-batch mismatch vs bf16 reference"

    # Large batch: exercises the multi-step (even) grid with a partial last
    # block (1200 rows -> 4 steps of 304).
    key, k_big = jax.random.split(key)
    big_state = jax.random.normal(k_big, (1200, state_dim), jnp.float32)
    big_out = jax.block_until_ready(actor_forward(big_state, prepared))
    assert big_out.shape == (1200, action_dim), big_out.shape
    assert jnp.allclose(big_out, actor_reference_bf16(big_state, params),
                        atol=1e-3, rtol=1e-3), "big-batch mismatch vs bf16 reference"

    print("KERNEL_OK")
</pallas_src>

<mosaic_0001>
module attributes {stable_mosaic.version = 11 : i64} {
  func.func @_actor_kernel(%arg0: i32, %arg1: memref<16x32xf32, #tpu.memory_space<vmem>>, %arg2: memref<32x256xbf16, #tpu.memory_space<vmem>>, %arg3: memref<1x256xf32, #tpu.memory_space<vmem>>, %arg4: memref<256x128xbf16, #tpu.memory_space<vmem>>, %arg5: memref<1x128xf32, #tpu.memory_space<vmem>>, %arg6: memref<128x128xbf16, #tpu.memory_space<vmem>>, %arg7: memref<1x128xf32, #tpu.memory_space<vmem>>, %arg8: memref<128x4xbf16, #tpu.memory_space<vmem>>, %arg9: memref<1x4xf32, #tpu.memory_space<vmem>>, %arg10: memref<16x4xf32, #tpu.memory_space<vmem>>) attributes {dimension_semantics = [#tpu.dimension_semantics<parallel>], iteration_bounds = array<i64: 1>, scalar_prefetch = 0 : i64, scratch_operands = 0 : i64, tpu.core_type = #tpu.core_type<tc>, window_params = [{transform_indices = @transform_0, window_bounds = array<i64: 16, 32>}, {pipeline_mode = #tpu.pipeline_mode<synchronous>, transform_indices = @transform_1, window_bounds = array<i64: 32, 256>}, {pipeline_mode = #tpu.pipeline_mode<synchronous>, transform_indices = @transform_2, window_bounds = array<i64: 1, 256>}, {pipeline_mode = #tpu.pipeline_mode<synchronous>, transform_indices = @transform_3, window_bounds = array<i64: 256, 128>}, {pipeline_mode = #tpu.pipeline_mode<synchronous>, transform_indices = @transform_4, window_bounds = array<i64: 1, 128>}, {pipeline_mode = #tpu.pipeline_mode<synchronous>, transform_indices = @transform_5, window_bounds = array<i64: 128, 128>}, {pipeline_mode = #tpu.pipeline_mode<synchronous>, transform_indices = @transform_6, window_bounds = array<i64: 1, 128>}, {pipeline_mode = #tpu.pipeline_mode<synchronous>, transform_indices = @transform_7, window_bounds = array<i64: 128, 4>}, {pipeline_mode = #tpu.pipeline_mode<synchronous>, transform_indices = @transform_8, window_bounds = array<i64: 1, 4>}, {transform_indices = @transform_9, window_bounds = array<i64: 16, 4>}]} {
    %c0 = arith.constant 0 : index
    %c0_0 = arith.constant 0 : index
    %0 = vector.load %arg1[%c0, %c0_0] : memref<16x32xf32, #tpu.memory_space<vmem>>, vector<16x32xf32>
    %1 = arith.truncf %0 : vector<16x32xf32> to vector<16x32xbf16>
    %c0_1 = arith.constant 0 : index
    %c0_2 = arith.constant 0 : index
    %2 = vector.load %arg2[%c0_1, %c0_2] : memref<32x256xbf16, #tpu.memory_space<vmem>>, vector<32x256xbf16>
    %cst = arith.constant dense<0.000000e+00> : vector<16x256xf32>
    %3 = tpu.matmul %1, %2, %cst {dimension_numbers = #tpu.dot_dimension_numbers<[1], [0], [0], [1], [0, 0, 1, 1], [], []>} : vector<16x32xbf16>, vector<32x256xbf16>, vector<16x256xf32> -> vector<16x256xf32>
    %c0_3 = arith.constant 0 : index
    %c0_4 = arith.constant 0 : index
    %4 = vector.load %arg3[%c0_3, %c0_4] : memref<1x256xf32, #tpu.memory_space<vmem>>, vector<1x256xf32>
    %5 = vector.broadcast %4 : vector<1x256xf32> to vector<16x256xf32>
    %6 = arith.addf %3, %5 : vector<16x256xf32>
    %cst_5 = arith.constant 0.000000e+00 : f32
    %7 = vector.broadcast %cst_5 : f32 to vector<16x256xf32>
    %8 = arith.maximumf %6, %7 : vector<16x256xf32>
    %9 = arith.truncf %8 : vector<16x256xf32> to vector<16x256xbf16>
    %c0_6 = arith.constant 0 : index
    %c0_7 = arith.constant 0 : index
    %10 = vector.load %arg4[%c0_6, %c0_7] : memref<256x128xbf16, #tpu.memory_space<vmem>>, vector<256x128xbf16>
    %cst_8 = arith.constant dense<0.000000e+00> : vector<16x128xf32>
    %11 = tpu.matmul %9, %10, %cst_8 {dimension_numbers = #tpu.dot_dimension_numbers<[1], [0], [0], [1], [0, 0, 1, 1], [], []>} : vector<16x256xbf16>, vector<256x128xbf16>, vector<16x128xf32> -> vector<16x128xf32>
    %c0_9 = arith.constant 0 : index
    %c0_10 = arith.constant 0 : index
    %12 = vector.load %arg5[%c0_9, %c0_10] : memref<1x128xf32, #tpu.memory_space<vmem>>, vector<1x128xf32>
    %13 = vector.broadcast %12 : vector<1x128xf32> to vector<16x128xf32>
    %14 = arith.addf %11, %13 : vector<16x128xf32>
    %cst_11 = arith.constant 0.000000e+00 : f32
    %15 = vector.broadcast %cst_11 : f32 to vector<16x128xf32>
    %16 = arith.maximumf %14, %15 : vector<16x128xf32>
    %17 = arith.truncf %16 : vector<16x128xf32> to vector<16x128xbf16>
    %c0_12 = arith.constant 0 : index
    %c0_13 = arith.constant 0 : index
    %18 = vector.load %arg6[%c0_12, %c0_13] : memref<128x128xbf16, #tpu.memory_space<vmem>>, vector<128x128xbf16>
    %cst_14 = arith.constant dense<0.000000e+00> : vector<16x128xf32>
    %19 = tpu.matmul %17, %18, %cst_14 {dimension_numbers = #tpu.dot_dimension_numbers<[1], [0], [0], [1], [0, 0, 1, 1], [], []>} : vector<16x128xbf16>, vector<128x128xbf16>, vector<16x128xf32> -> vector<16x128xf32>
    %c0_15 = arith.constant 0 : index
    %c0_16 = arith.constant 0 : index
    %20 = vector.load %arg7[%c0_15, %c0_16] : memref<1x128xf32, #tpu.memory_space<vmem>>, vector<1x128xf32>
    %21 = vector.broadcast %20 : vector<1x128xf32> to vector<16x128xf32>
    %22 = arith.addf %19, %21 : vector<16x128xf32>
    %cst_17 = arith.constant 0.000000e+00 : f32
    %23 = vector.broadcast %cst_17 : f32 to vector<16x128xf32>
    %24 = arith.maximumf %22, %23 : vector<16x128xf32>
    %25 = arith.truncf %24 : vector<16x128xf32> to vector<16x128xbf16>
    %c0_18 = arith.constant 0 : index
    %c0_19 = arith.constant 0 : index
    %26 = vector.load %arg8[%c0_18, %c0_19] : memref<128x4xbf16, #tpu.memory_space<vmem>>, vector<128x4xbf16>
    %cst_20 = arith.constant dense<0.000000e+00> : vector<16x4xf32>
    %27 = tpu.matmul %25, %26, %cst_20 {dimension_numbers = #tpu.dot_dimension_numbers<[1], [0], [0], [1], [0, 0, 1, 1], [], []>} : vector<16x128xbf16>, vector<128x4xbf16>, vector<16x4xf32> -> vector<16x4xf32>
    %c0_21 = arith.constant 0 : index
    %c0_22 = arith.constant 0 : index
    %28 = vector.load %arg9[%c0_21, %c0_22] : memref<1x4xf32, #tpu.memory_space<vmem>>, vector<1x4xf32>
    %29 = vector.broadcast %28 : vector<1x4xf32> to vector<16x4xf32>
    %30 = arith.addf %27, %29 : vector<16x4xf32>
    %31 = math.tanh %30 : vector<16x4xf32>
    %c0_23 = arith.constant 0 : index
    %c0_24 = arith.constant 0 : index
    %32 = vector.load %arg10[%c0_23, %c0_24] : memref<16x4xf32, #tpu.memory_space<vmem>>, vector<16x4xf32>
    tpu.vector_store %arg10[%c0_23, %c0_24], %31 {strides = array<i32>} : memref<16x4xf32, #tpu.memory_space<vmem>>, vector<16x4xf32>,
    return
  }
  func.func @transform_0(%arg0: i32) -> (i32, i32) {
    %c0_i32 = arith.constant 0 : i32
    %c0_i32_0 = arith.constant 0 : i32
    return %arg0, %c0_i32 : i32, i32
  }
  func.func @transform_1(%arg0: i32) -> (i32, i32) {
    %c0_i32 = arith.constant 0 : i32
    %c0_i32_0 = arith.constant 0 : i32
    %c0_i32_1 = arith.constant 0 : i32
    return %c0_i32, %c0_i32_0 : i32, i32
  }
  func.func @transform_2(%arg0: i32) -> (i32, i32) {
    %c0_i32 = arith.constant 0 : i32
    %c0_i32_0 = arith.constant 0 : i32
    %c0_i32_1 = arith.constant 0 : i32
    return %c0_i32, %c0_i32_0 : i32, i32
  }
  func.func @transform_3(%arg0: i32) -> (i32, i32) {
    %c0_i32 = arith.constant 0 : i32
    %c0_i32_0 = arith.constant 0 : i32
    %c0_i32_1 = arith.constant 0 : i32
    return %c0_i32, %c0_i32_0 : i32, i32
  }
  func.func @transform_4(%arg0: i32) -> (i32, i32) {
    %c0_i32 = arith.constant 0 : i32
    %c0_i32_0 = arith.constant 0 : i32
    %c0_i32_1 = arith.constant 0 : i32
    return %c0_i32, %c0_i32_0 : i32, i32
  }
  func.func @transform_5(%arg0: i32) -> (i32, i32) {
    %c0_i32 = arith.constant 0 : i32
    %c0_i32_0 = arith.constant 0 : i32
    %c0_i32_1 = arith.constant 0 : i32
    return %c0_i32, %c0_i32_0 : i32, i32
  }
  func.func @transform_6(%arg0: i32) -> (i32, i32) {
    %c0_i32 = arith.constant 0 : i32
    %c0_i32_0 = arith.constant 0 : i32
    %c0_i32_1 = arith.constant 0 : i32
    return %c0_i32, %c0_i32_0 : i32, i32
  }
  func.func @transform_7(%arg0: i32) -> (i32, i32) {
    %c0_i32 = arith.constant 0 : i32
    %c0_i32_0 = arith.constant 0 : i32
    %c0_i32_1 = arith.constant 0 : i32
    return %c0_i32, %c0_i32_0 : i32, i32
  }
  func.func @transform_8(%arg0: i32) -> (i32, i32) {
    %c0_i32 = arith.constant 0 : i32
    %c0_i32_0 = arith.constant 0 : i32
    %c0_i32_1 = arith.constant 0 : i32
    return %c0_i32, %c0_i32_0 : i32, i32
  }
  func.func @transform_9(%arg0: i32) -> (i32, i32) {
    %c0_i32 = arith.constant 0 : i32
    %c0_i32_0 = arith.constant 0 : i32
    return %arg0, %c0_i32 : i32, i32
  }
}

</mosaic_0001>

<llo_original>
// kernel: _actor_forward_impl.1
$region0: #{_actor_forward_impl.1}
  #allocation0 [shape = 'u32[]', space=smem, size = 0x4, offset = 0x4, fixed_abs, tag = 'smem constant byte address 0x4 - core index']
  #allocation1 [shape = 'u32[144,128]{1,0:T(1,128)}', space=vmem, size = 0x12000, scoped, tag = 'internal scratch']
  %s0 = inlined_call_operand.vmem [shape: f32[8,32], index: 0, kind: input, shape index: {}]
  %s1 = inlined_call_operand.hbm [shape: bf16[32,256], index: 1, kind: input, shape index: {}]
  %s2 = inlined_call_operand.vmem [shape: f32[1,256], index: 2, kind: input, shape index: {}]
  %s3 = inlined_call_operand.hbm [shape: bf16[256,128], index: 3, kind: input, shape index: {}]
  %s4 = inlined_call_operand.vmem [shape: f32[1,128], index: 4, kind: input, shape index: {}]
  %s5 = inlined_call_operand.vmem [shape: bf16[128,128], index: 5, kind: input, shape index: {}]
  %s6 = inlined_call_operand.vmem [shape: f32[1,128], index: 6, kind: input, shape index: {}]
  %s7 = inlined_call_operand.vmem [shape: bf16[128,4], index: 7, kind: input, shape index: {}]
  %s8 = inlined_call_operand.vmem [shape: f32[1,4], index: 8, kind: input, shape index: {}]
  %s9 = inlined_call_operand.vmem [shape: f32[8,4], index: 9, kind: output, shape index: {}]
  %s10 = sld [smem:[#allocation0]]
  $region88: #{_actor_forward_impl.1} parent=0
    _
  %s12 = ssub.s32 1, %s10
  %s13 = scalar_select 0, %s12, %s10
  $region1: #{_actor_forward_impl.1} parent=0
    #allocation2 [shape = 'u8[16384]{0}', space=vmem, size = 0x4000, scoped, tag = 'input window, operand 1, single buffered']
    #allocation3 [shape = 's32[1]{0}', space=sflag, size = 0x4, scoped, tag = 'scoped memory for _actor_forward_impl.1']
    #allocation4 [shape = 'u8[65536]{0}', space=vmem, size = 0x10000, scoped, tag = 'input window, operand 3, single buffered']
    #allocation5 [shape = 's32[1]{0}', space=sflag, size = 0x4, scoped, tag = 'scoped memory for _actor_forward_impl.1']
    #allocation6 [shape = 'u8[8192]{0}', space=vmem, size = 0x2000, scoped, tag = 'output window, operand 0, single buffered']
    %14 = vsyncpa [#allocation3], 0
    %15 = vsyncpa [#allocation5], 0
    // Predicated region
    $region2: #{_actor_forward_impl.1} parent=1 // pred_check
      _
    $region3: #{_actor_forward_impl.1} parent=1 // pred_check_branch
      %17 = sbr.rel (0) target = $region5
    $region4: #{_actor_forward_impl.1} parent=1 // pred_region
      _
    $region5: #{_actor_forward_impl.1} parent=1 // pred_fallthru
      _
    // Predicated region
    $region6: #{_actor_forward_impl.1} parent=1 // pred_check
      _
    $region7: #{_actor_forward_impl.1} parent=1 // pred_check_branch
      %19 = sbr.rel (0) target = $region9
    $region8: #{_actor_forward_impl.1} parent=1 // pred_region
      %s21 = ssub.s32 512, 512
      %22 = vsyncadd [#allocation3], %s21
      %s23 = sshll.u32 [#allocation2], 4
      %s24 = int_to_ptr.vmem [resolvable:$true] %s23
      %29 = dma.hbm_to_vmem [thread:$0]  %s1, 512, %s24, [#allocation3], 128, 128, 8
    $region9: #{_actor_forward_impl.1} parent=1 // pred_fallthru
      _
    // Predicated region
    $region10: #{_actor_forward_impl.1} parent=1 // pred_check
      _
    $region11: #{_actor_forward_impl.1} parent=1 // pred_check_branch
      %31 = sbr.rel (0) target = $region13
    $region12: #{_actor_forward_impl.1} parent=1 // pred_region
      _
    $region13: #{_actor_forward_impl.1} parent=1 // pred_fallthru
      _
    // Predicated region
    $region14: #{_actor_forward_impl.1} parent=1 // pred_check
      _
    $region15: #{_actor_forward_impl.1} parent=1 // pred_check_branch
      %33 = sbr.rel (0) target = $region17
    $region16: #{_actor_forward_impl.1} parent=1 // pred_region
      %s35 = ssub.s32 2048, 2048
      %36 = vsyncadd [#allocation5], %s35
      %s37 = sshll.u32 [#allocation4], 4
      %s38 = int_to_ptr.vmem [resolvable:$true] %s37
      %43 = dma.hbm_to_vmem [thread:$0]  %s3, 2048, %s38, [#allocation5], 64, 64, 4
    $region17: #{_actor_forward_impl.1} parent=1 // pred_fallthru
      _
    // Predicated region
    $region18: #{_actor_forward_impl.1} parent=1 // pred_check
      _
    $region19: #{_actor_forward_impl.1} parent=1 // pred_check_branch
      %45 = sbr.rel (0) target = $region21
    $region20: #{_actor_forward_impl.1} parent=1 // pred_region
      _
    $region21: #{_actor_forward_impl.1} parent=1 // pred_fallthru
      _
    // Predicated region
    $region22: #{_actor_forward_impl.1} parent=1 // pred_check
      _
    $region23: #{_actor_forward_impl.1} parent=1 // pred_check_branch
      %47 = sbr.rel (0) target = $region25
    $region24: #{_actor_forward_impl.1} parent=1 // pred_region
      _
    $region25: #{_actor_forward_impl.1} parent=1 // pred_fallthru
      _
    // Predicated region
    $region26: #{_actor_forward_impl.1} parent=1 // pred_check
      _
    $region27: #{_actor_forward_impl.1} parent=1 // pred_check_branch
      %49 = sbr.rel (0) target = $region29
    $region28: #{_actor_forward_impl.1} parent=1 // pred_region
      _
    $region29: #{_actor_forward_impl.1} parent=1 // pred_fallthru
      _
    // Predicated region
    $region30: #{_actor_forward_impl.1} parent=1 // pred_check
      _
    $region31: #{_actor_forward_impl.1} parent=1 // pred_check_branch
      %51 = sbr.rel (0) target = $region33
    $region32: #{_actor_forward_impl.1} parent=1 // pred_region
      _
    $region33: #{_actor_forward_impl.1} parent=1 // pred_fallthru
      _
    // Predicated region
    $region34: #{_actor_forward_impl.1} parent=1 // pred_check
      _
    $region35: #{_actor_forward_impl.1} parent=1 // pred_check_branch
      %53 = sbr.rel (0) target = $region37
    $region36: #{_actor_forward_impl.1} parent=1 // pred_region
      _
    $region37: #{_actor_forward_impl.1} parent=1 // pred_fallthru
      _
    // Predicated region
    $region38: #{_actor_forward_impl.1} parent=1 // pred_check
      _
    $region39: #{_actor_forward_impl.1} parent=1 // pred_check_branch
      %55 = sbr.rel (0) target = $region41
    $region40: #{_actor_forward_impl.1} parent=1 // pred_region
      %56 = dma.done [#allocation3], 512
    $region41: #{_actor_forward_impl.1} parent=1 // pred_fallthru
      _
    // Predicated region
    $region42: #{_actor_forward_impl.1} parent=1 // pred_check
      _
    $region43: #{_actor_forward_impl.1} parent=1 // pred_check_branch
      %58 = sbr.rel (0) target = $region45
    $region44: #{_actor_forward_impl.1} parent=1 // pred_region
      %59 = dma.done [#allocation5], 2048
    $region45: #{_actor_forward_impl.1} parent=1 // pred_fallthru
      _
    %v61 = vld [vmem:[%s0] sm:$0xff]
    %v62 = vld [vmem:[%s0 + $0x8] sm:$0xff]
    %v63 = vpack.c.bf16 %v62, %v61
    %v64 = vld [vmem:[#allocation2] sm:$0xff]
    %v65 = vld [vmem:[#allocation2 + $0x8] sm:$0xff]
    %v66 = vld [vmem:[#allocation2 + $0x10] sm:$0xff]
    %v67 = vld [vmem:[#allocation2 + $0x18] sm:$0xff]
    %v68 = vld [vmem:[%s2] sm:$0x3]
    %v70 = vlaneseq
    %v71 = vshrl.u32 %v70, 7
    %v72 = vsub.s32 0, %v71
    %v73 = vrot.slane %v68, %v72
    %v74 = vlaneseq
    %v75 = vshrl.u32 %v74, 7
    %v76 = vsub.s32 1, %v75
    %v77 = vrot.slane %v68, %v76
    %v84 = vunpack.c.l.b16 %v64
    %v85 = vunpack.c.h.b16 %v64
    %v86 = vunpack.c.l.b16 %v65
    %v87 = vunpack.c.h.b16 %v65
    %v88 = vunpack.c.l.b16 %v66
    %v89 = vunpack.c.h.b16 %v66
    %v90 = vunpack.c.l.b16 %v67
    %v91 = vunpack.c.h.b16 %v67
    %v92 = vpack.c.b16 %v86, %v84
    %v93 = vpack.c.b16 %v87, %v85
    %v94 = vpack.c.b16 %v90, %v88
    %v95 = vpack.c.b16 %v91, %v89
    %vm100 = vcmask 261120
    %v102 = vsel %vm100, %v63, 0
    %104 = vmatprep.subr.bf16.mxu0 %v93
    %105 = vmatpush1.bf16.msra.mxu0 %v92
    %106 = vmatprep.subr.bf16.mxu0 %v95
    %107 = vmatpush1.bf16.msra.mxu0 %v94
    %108 = vmatprep.subr.bf16.mxu0 0
    %109 = vmatpush1.bf16.msra.mxu0 0
    %110 = vmatprep.subr.bf16.mxu0 0
    %111 = vmatpush1.bf16.msra.mxu0 0
    %112 = vmatprep.subr.bf16.mxu0 0
    %113 = vmatpush1.bf16.msra.mxu0 0
    %114 = vmatprep.subr.bf16.mxu0 0
    %115 = vmatpush1.bf16.msra.mxu0 0
    %116 = vmatprep.subr.bf16.mxu0 0
    %117 = vmatpush1.bf16.msra.mxu0 0
    %118 = vmatprep.subr.bf16.mxu0 0
    %119 = vmatpush1.bf16.msra.mxu0 0
    %120 = vmatprep.subr.bf16.mxu0 0
    %121 = vmatpush1.bf16.msra.mxu0 0
    %122 = vmatprep.subr.bf16.mxu0 0
    %123 = vmatpush1.bf16.msra.mxu0 0
    %124 = vmatprep.subr.bf16.mxu0 0
    %125 = vmatpush1.bf16.msra.mxu0 0
    %126 = vmatprep.subr.bf16.mxu0 0
    %127 = vmatpush1.bf16.msra.mxu0 0
    %128 = vmatprep.subr.bf16.mxu0 0
    %129 = vmatpush1.bf16.msra.mxu0 0
    %130 = vmatprep.subr.bf16.mxu0 0
    %131 = vmatpush1.bf16.msra.mxu0 0
    %132 = vmatprep.subr.bf16.mxu0 0
    %133 = vmatpush1.bf16.msra.mxu0 0
    %134 = vmatprep.subr.bf16.mxu0 0
    %135 = vmatpush1.bf16.msra.mxu0 0
    %136 = vmatprep.mubr.bf16.mxu0 0
    %137 = vmatmul.mubr.bf16.gmra.mrb[0].mxu0 %v102
    %v138 = vpop.f32.mrb[0].mxu0
    %v139 = vadd.f32 %v73, %v138
    %v140 = vpop.f32.mrb[0].mxu0
    %v141 = vadd.f32 %v77, %v140
    %v142 = vpop.f32.mrb[0].mxu0
    %v143 = vadd.f32 %v73, %v142
    %v144 = vpop.f32.mrb[0].mxu0
    %v145 = vadd.f32 %v77, %v144
    %146 = vdwg.mxu0
    %v147 = vmax.f32 %v139, 0.0
    %v148 = vmax.f32 %v141, 0.0
    %v149 = vmax.f32 %v143, 0.0
    %v150 = vmax.f32 %v145, 0.0
    %v151 = vpack.c.bf16 %v149, %v147
    %v152 = vpack.c.bf16 %v150, %v148
    %v153 = vld [vmem:[#allocation4] sm:$0xf]
    %v154 = vld [vmem:[#allocation4 + $0x4] sm:$0xf]
    %v155 = vld [vmem:[#allocation4 + $0x8] sm:$0xf]
    %v156 = vld [vmem:[#allocation4 + $0xc] sm:$0xf]
    %v157 = vld [vmem:[#allocation4 + $0x10] sm:$0xf]
    %v158 = vld [vmem:[#allocation4 + $0x14] sm:$0xf]
    %v159 = vld [vmem:[#allocation4 + $0x18] sm:$0xf]
    %v160 = vld [vmem:[#allocation4 + $0x1c] sm:$0xf]
    %v161 = vld [vmem:[#allocation4 + $0x20] sm:$0xf]
    %v162 = vld [vmem:[#allocation4 + $0x24] sm:$0xf]
    %v163 = vld [vmem:[#allocation4 + $0x28] sm:$0xf]
    %v164 = vld [vmem:[#allocation4 + $0x2c] sm:$0xf]
    %v165 = vld [vmem:[#allocation4 + $0x30] sm:$0xf]
    %v166 = vld [vmem:[#allocation4 + $0x34] sm:$0xf]
    %v167 = vld [vmem:[#allocation4 + $0x38] sm:$0xf]
    %v168 = vld [vmem:[#allocation4 + $0x3c] sm:$0xf]
    %v169 = vld [vmem:[#allocation4 + $0x40] sm:$0xf]
    %v170 = vld [vmem:[#allocation4 + $0x44] sm:$0xf]
    %v171 = vld [vmem:[#allocation4 + $0x48] sm:$0xf]
    %v172 = vld [vmem:[#allocation4 + $0x4c] sm:$0xf]
    %v173 = vld [vmem:[#allocation4 + $0x50] sm:$0xf]
    %v174 = vld [vmem:[#allocation4 + $0x54] sm:$0xf]
    %v175 = vld [vmem:[#allocation4 + $0x58] sm:$0xf]
    %v176 = vld [vmem:[#allocation4 + $0x5c] sm:$0xf]
    %v177 = vld [vmem:[#allocation4 + $0x60] sm:$0xf]
    %v178 = vld [vmem:[#allocation4 + $0x64] sm:$0xf]
    %v179 = vld [vmem:[#allocation4 + $0x68] sm:$0xf]
    %v180 = vld [vmem:[#allocation4 + $0x6c] sm:$0xf]
    %v181 = vld [vmem:[#allocation4 + $0x70] sm:$0xf]
    %v182 = vld [vmem:[#allocation4 + $0x74] sm:$0xf]
    %v183 = vld [vmem:[#allocation4 + $0x78] sm:$0xf]
    %v184 = vld [vmem:[#allocation4 + $0x7c] sm:$0xf]
    %v185 = vld [vmem:[%s4] sm:$0x1]
    %v187 = vlaneseq
    %v188 = vshrl.u32 %v187, 7
    %v189 = vsub.s32 0, %v188
    %v190 = vrot.slane %v185, %v189
    %v224 = vunpack.c.l.b16 %v153
    %v225 = vunpack.c.l.b16 %v154
    %v226 = vunpack.c.l.b16 %v155
    %v227 = vunpack.c.l.b16 %v156
    %v228 = vunpack.c.l.b16 %v157
    %v229 = vunpack.c.l.b16 %v158
    %v230 = vunpack.c.l.b16 %v159
    %v231 = vunpack.c.l.b16 %v160
    %v232 = vunpack.c.l.b16 %v161
    %v233 = vunpack.c.l.b16 %v162
    %v234 = vunpack.c.l.b16 %v163
    %v235 = vunpack.c.l.b16 %v164
    %v236 = vunpack.c.l.b16 %v165
    %v237 = vunpack.c.l.b16 %v166
    %v238 = vunpack.c.l.b16 %v167
    %v239 = vunpack.c.l.b16 %v168
    %v240 = vunpack.c.l.b16 %v169
    %v241 = vunpack.c.l.b16 %v170
    %v242 = vunpack.c.l.b16 %v171
    %v243 = vunpack.c.l.b16 %v172
    %v244 = vunpack.c.l.b16 %v173
    %v245 = vunpack.c.l.b16 %v174
    %v246 = vunpack.c.l.b16 %v175
    %v247 = vunpack.c.l.b16 %v176
    %v248 = vunpack.c.l.b16 %v177
    %v249 = vunpack.c.l.b16 %v178
    %v250 = vunpack.c.l.b16 %v179
    %v251 = vunpack.c.l.b16 %v180
    %v252 = vunpack.c.l.b16 %v181
    %v253 = vunpack.c.l.b16 %v182
    %v254 = vunpack.c.l.b16 %v183
    %v255 = vunpack.c.l.b16 %v184
    %v256 = vpack.c.b16 %v225, %v224
    %v257 = vpack.c.b16 %v227, %v226
    %v258 = vpack.c.b16 %v229, %v228
    %v259 = vpack.c.b16 %v231, %v230
    %v260 = vpack.c.b16 %v233, %v232
    %v261 = vpack.c.b16 %v235, %v234
    %v262 = vpack.c.b16 %v237, %v236
    %v263 = vpack.c.b16 %v239, %v238
    %v264 = vpack.c.b16 %v241, %v240
    %v265 = vpack.c.b16 %v243, %v242
    %v266 = vpack.c.b16 %v245, %v244
    %v267 = vpack.c.b16 %v247, %v246
    %v268 = vpack.c.b16 %v249, %v248
    %v269 = vpack.c.b16 %v251, %v250
    %v270 = vpack.c.b16 %v253, %v252
    %v271 = vpack.c.b16 %v255, %v254
    %288 = vmatprep.subr.bf16.mxu0 0
    %289 = vmatpush1.bf16.msra.mxu0 %v256
    %290 = vmatprep.subr.bf16.mxu0 0
    %291 = vmatpush1.bf16.msra.mxu0 %v257
    %292 = vmatprep.subr.bf16.mxu0 0
    %293 = vmatpush1.bf16.msra.mxu0 %v258
    %294 = vmatprep.subr.bf16.mxu0 0
    %295 = vmatpush1.bf16.msra.mxu0 %v259
    %296 = vmatprep.subr.bf16.mxu0 0
    %297 = vmatpush1.bf16.msra.mxu0 %v260
    %298 = vmatprep.subr.bf16.mxu0 0
    %299 = vmatpush1.bf16.msra.mxu0 %v261
    %300 = vmatprep.subr.bf16.mxu0 0
    %301 = vmatpush1.bf16.msra.mxu0 %v262
    %302 = vmatprep.subr.bf16.mxu0 0
    %303 = vmatpush1.bf16.msra.mxu0 %v263
    %304 = vmatprep.subr.bf16.mxu0 0
    %305 = vmatpush1.bf16.msra.mxu0 %v264
    %306 = vmatprep.subr.bf16.mxu0 0
    %307 = vmatpush1.bf16.msra.mxu0 %v265
    %308 = vmatprep.subr.bf16.mxu0 0
    %309 = vmatpush1.bf16.msra.mxu0 %v266
    %310 = vmatprep.subr.bf16.mxu0 0
    %311 = vmatpush1.bf16.msra.mxu0 %v267
    %312 = vmatprep.subr.bf16.mxu0 0
    %313 = vmatpush1.bf16.msra.mxu0 %v268
    %314 = vmatprep.subr.bf16.mxu0 0
    %315 = vmatpush1.bf16.msra.mxu0 %v269
    %316 = vmatprep.subr.bf16.mxu0 0
    %317 = vmatpush1.bf16.msra.mxu0 %v270
    %318 = vmatprep.subr.bf16.mxu0 0
    %319 = vmatpush1.bf16.msra.mxu0 %v271
    %320 = vmatprep.mubr.bf16.mxu0 %v152
    %321 = vmatmul.mubr.bf16.gmra.mrb[0].mxu0 %v151
    %v322 = vpop.f32.mrb[0].mxu0
    %v323 = vadd.f32 %v190, %v322
    %v324 = vpop.f32.mrb[0].mxu0
    %v325 = vpop.f32.mrb[0].mxu0
    %v326 = vadd.f32 %v190, %v325
    %v327 = vpop.f32.mrb[0].mxu0
    %328 = vdwg.mxu0
    %v329 = vmax.f32 %v323, 0.0
    %v330 = vmax.f32 %v326, 0.0
    %v331 = vpack.c.bf16 %v330, %v329
    %v332 = vld [vmem:[%s5] sm:$0xf]
    %v333 = vld [vmem:[%s5 + $0x4] sm:$0xf]
    %v334 = vld [vmem:[%s5 + $0x8] sm:$0xf]
    %v335 = vld [vmem:[%s5 + $0xc] sm:$0xf]
    %v336 = vld [vmem:[%s5 + $0x10] sm:$0xf]
    %v337 = vld [vmem:[%s5 + $0x14] sm:$0xf]
    %v338 = vld [vmem:[%s5 + $0x18] sm:$0xf]
    %v339 = vld [vmem:[%s5 + $0x1c] sm:$0xf]
    %v340 = vld [vmem:[%s5 + $0x20] sm:$0xf]
    %v341 = vld [vmem:[%s5 + $0x24] sm:$0xf]
    %v342 = vld [vmem:[%s5 + $0x28] sm:$0xf]
    %v343 = vld [vmem:[%s5 + $0x2c] sm:$0xf]
    %v344 = vld [vmem:[%s5 + $0x30] sm:$0xf]
    %v345 = vld [vmem:[%s5 + $0x34] sm:$0xf]
    %v346 = vld [vmem:[%s5 + $0x38] sm:$0xf]
    %v347 = vld [vmem:[%s5 + $0x3c] sm:$0xf]
    %v348 = vld [vmem:[%s6] sm:$0x1]
    %v350 = vlaneseq
    %v351 = vshrl.u32 %v350, 7
    %v352 = vsub.s32 0, %v351
    %v353 = vrot.slane %v348, %v352
    %v371 = vunpack.c.l.b16 %v332
    %v372 = vunpack.c.l.b16 %v333
    %v373 = vunpack.c.l.b16 %v334
    %v374 = vunpack.c.l.b16 %v335
    %v375 = vunpack.c.l.b16 %v336
    %v376 = vunpack.c.l.b16 %v337
    %v377 = vunpack.c.l.b16 %v338
    %v378 = vunpack.c.l.b16 %v339
    %v379 = vunpack.c.l.b16 %v340
    %v380 = vunpack.c.l.b16 %v341
    %v381 = vunpack.c.l.b16 %v342
    %v382 = vunpack.c.l.b16 %v343
    %v383 = vunpack.c.l.b16 %v344
    %v384 = vunpack.c.l.b16 %v345
    %v385 = vunpack.c.l.b16 %v346
    %v386 = vunpack.c.l.b16 %v347
    %v387 = vpack.c.b16 %v372, %v371
    %v388 = vpack.c.b16 %v374, %v373
    %v389 = vpack.c.b16 %v376, %v375
    %v390 = vpack.c.b16 %v378, %v377
    %v391 = vpack.c.b16 %v380, %v379
    %v392 = vpack.c.b16 %v382, %v381
    %v393 = vpack.c.b16 %v384, %v383
    %v394 = vpack.c.b16 %v386, %v385
    %403 = vmatprep.subr.bf16.mxu0 0
    %404 = vmatpush1.bf16.msra.mxu0 %v387
    %405 = vmatprep.subr.bf16.mxu0 0
    %406 = vmatpush1.bf16.msra.mxu0 %v388
    %407 = vmatprep.subr.bf16.mxu0 0
    %408 = vmatpush1.bf16.msra.mxu0 %v389
    %409 = vmatprep.subr.bf16.mxu0 0
    %410 = vmatpush1.bf16.msra.mxu0 %v390
    %411 = vmatprep.subr.bf16.mxu0 0
    %412 = vmatpush1.bf16.msra.mxu0 %v391
    %413 = vmatprep.subr.bf16.mxu0 0
    %414 = vmatpush1.bf16.msra.mxu0 %v392
    %415 = vmatprep.subr.bf16.mxu0 0
    %416 = vmatpush1.bf16.msra.mxu0 %v393
    %417 = vmatprep.subr.bf16.mxu0 0
    %418 = vmatpush1.bf16.msra.mxu0 %v394
    %419 = vmatprep.subr.bf16.mxu0 0
    %420 = vmatpush1.bf16.msra.mxu0 0
    %421 = vmatprep.subr.bf16.mxu0 0
    %422 = vmatpush1.bf16.msra.mxu0 0
    %423 = vmatprep.subr.bf16.mxu0 0
    %424 = vmatpush1.bf16.msra.mxu0 0
    %425 = vmatprep.subr.bf16.mxu0 0
    %426 = vmatpush1.bf16.msra.mxu0 0
    %427 = vmatprep.subr.bf16.mxu0 0
    %428 = vmatpush1.bf16.msra.mxu0 0
    %429 = vmatprep.subr.bf16.mxu0 0
    %430 = vmatpush1.bf16.msra.mxu0 0
    %431 = vmatprep.subr.bf16.mxu0 0
    %432 = vmatpush1.bf16.msra.mxu0 0
    %433 = vmatprep.subr.bf16.mxu0 0
    %434 = vmatpush1.bf16.msra.mxu0 0
    %435 = vmatprep.mubr.bf16.mxu0 0
    %436 = vmatmul.mubr.bf16.gmra.mrb[0].mxu0 %v331
    %v437 = vpop.f32.mrb[0].mxu0
    %v438 = vadd.f32 %v353, %v437
    %v439 = vpop.f32.mrb[0].mxu0
    %v440 = vpop.f32.mrb[0].mxu0
    %v441 = vadd.f32 %v353, %v440
    %v442 = vpop.f32.mrb[0].mxu0
    %443 = vdwg.mxu0
    %v444 = vmax.f32 %v438, 0.0
    %v445 = vmax.f32 %v441, 0.0
    %v446 = vpack.c.bf16 %v445, %v444
    %v447 = vld [vmem:[%s7] sm:$0xf]
    %v448 = vld [vmem:[%s7 + $0x4] sm:$0xf]
    %v449 = vld [vmem:[%s7 + $0x8] sm:$0xf]
    %v450 = vld [vmem:[%s7 + $0xc] sm:$0xf]
    %v451 = vld [vmem:[%s7 + $0x10] sm:$0xf]
    %v452 = vld [vmem:[%s7 + $0x14] sm:$0xf]
    %v453 = vld [vmem:[%s7 + $0x18] sm:$0xf]
    %v454 = vld [vmem:[%s7 + $0x1c] sm:$0xf]
    %v455 = vld [vmem:[%s7 + $0x20] sm:$0xf]
    %v456 = vld [vmem:[%s7 + $0x24] sm:$0xf]
    %v457 = vld [vmem:[%s7 + $0x28] sm:$0xf]
    %v458 = vld [vmem:[%s7 + $0x2c] sm:$0xf]
    %v459 = vld [vmem:[%s7 + $0x30] sm:$0xf]
    %v460 = vld [vmem:[%s7 + $0x34] sm:$0xf]
    %v461 = vld [vmem:[%s7 + $0x38] sm:$0xf]
    %v462 = vld [vmem:[%s7 + $0x3c] sm:$0xf]
    %v463 = vld [vmem:[%s8] sm:$0x1]
    %v465 = vlaneseq
    %v466 = vshrl.u32 %v465, 7
    %v467 = vsub.s32 0, %v466
    %v468 = vrot.slane %v463, %v467
    %v486 = vunpack.c.l.b16 %v447
    %v487 = vunpack.c.l.b16 %v448
    %v488 = vunpack.c.l.b16 %v449
    %v489 = vunpack.c.l.b16 %v450
    %v490 = vunpack.c.l.b16 %v451
    %v491 = vunpack.c.l.b16 %v452
    %v492 = vunpack.c.l.b16 %v453
    %v493 = vunpack.c.l.b16 %v454
    %v494 = vunpack.c.l.b16 %v455
    %v495 = vunpack.c.l.b16 %v456
    %v496 = vunpack.c.l.b16 %v457
    %v497 = vunpack.c.l.b16 %v458
    %v498 = vunpack.c.l.b16 %v459
    %v499 = vunpack.c.l.b16 %v460
    %v500 = vunpack.c.l.b16 %v461
    %v501 = vunpack.c.l.b16 %v462
    %v502 = vpack.c.b16 %v487, %v486
    %v503 = vpack.c.b16 %v489, %v488
    %v504 = vpack.c.b16 %v491, %v490
    %v505 = vpack.c.b16 %v493, %v492
    %v506 = vpack.c.b16 %v495, %v494
    %v507 = vpack.c.b16 %v497, %v496
    %v508 = vpack.c.b16 %v499, %v498
    %v509 = vpack.c.b16 %v501, %v500
    %518 = vmatprep.subr.bf16.mxu0 0
    %519 = vmatpush1.bf16.msra.mxu0 %v502
    %520 = vmatprep.subr.bf16.mxu0 0
    %521 = vmatpush1.bf16.msra.mxu0 %v503
    %522 = vmatprep.subr.bf16.mxu0 0
    %523 = vmatpush1.bf16.msra.mxu0 %v504
    %524 = vmatprep.subr.bf16.mxu0 0
    %525 = vmatpush1.bf16.msra.mxu0 %v505
    %526 = vmatprep.subr.bf16.mxu0 0
    %527 = vmatpush1.bf16.msra.mxu0 %v506
    %528 = vmatprep.subr.bf16.mxu0 0
    %529 = vmatpush1.bf16.msra.mxu0 %v507
    %530 = vmatprep.subr.bf16.mxu0 0
    %531 = vmatpush1.bf16.msra.mxu0 %v508
    %532 = vmatprep.subr.bf16.mxu0 0
    %533 = vmatpush1.bf16.msra.mxu0 %v509
    %534 = vmatprep.subr.bf16.mxu0 0
    %535 = vmatpush1.bf16.msra.mxu0 0
    %536 = vmatprep.subr.bf16.mxu0 0
    %537 = vmatpush1.bf16.msra.mxu0 0
    %538 = vmatprep.subr.bf16.mxu0 0
    %539 = vmatpush1.bf16.msra.mxu0 0
    %540 = vmatprep.subr.bf16.mxu0 0
    %541 = vmatpush1.bf16.msra.mxu0 0
    %542 = vmatprep.subr.bf16.mxu0 0
    %543 = vmatpush1.bf16.msra.mxu0 0
    %544 = vmatprep.subr.bf16.mxu0 0
    %545 = vmatpush1.bf16.msra.mxu0 0
    %546 = vmatprep.subr.bf16.mxu0 0
    %547 = vmatpush1.bf16.msra.mxu0 0
    %548 = vmatprep.subr.bf16.mxu0 0
    %549 = vmatpush1.bf16.msra.mxu0 0
    %550 = vmatprep.mubr.bf16.mxu0 0
    %551 = vmatmul.mubr.bf16.gmra.mrb[0].mxu0 %v446
    %v552 = vpop.f32.mrb[0].mxu0
    %v553 = vadd.f32 %v468, %v552
    %v554 = vpop.f32.mrb[0].mxu0
    %v555 = vpop.f32.mrb[0].mxu0
    %v556 = vadd.f32 %v468, %v555
    %v557 = vpop.f32.mrb[0].mxu0
    %558 = vdwg.mxu0
    %v559 = vtanh.pop %v553
    %v560 = vtanh.pop %v556
    %vm561 = vcmask 31744
    %562 = vst.msk [vmem:[#allocation6] sm:$0xff] %vm561, %v559
    %563 = vst.msk [vmem:[#allocation6 + $0x8] sm:$0xff] %vm561, %v560
    // Predicated region
    $region46: #{_actor_forward_impl.1} parent=1 // pred_check
      _
    $region47: #{_actor_forward_impl.1} parent=1 // pred_check_branch
      %565 = sbr.rel (0) target = $region49
    $region48: #{_actor_forward_impl.1} parent=1 // pred_region
      // Predicated region
      $region50: #{_actor_forward_impl.1} parent=48 // pred_check
        _
      $region51: #{_actor_forward_impl.1} parent=48 // pred_check_branch
        %567 = sbr.rel (0) target = $region53
      $region52: #{_actor_forward_impl.1} parent=48 // pred_region
        // Predicated region
        $region54: #{_actor_forward_impl.1} parent=52 // pred_check
          _
        $region55: #{_actor_forward_impl.1} parent=52 // pred_check_branch
          %569 = sbr.rel (0) target = $region57
        $region56: #{_actor_forward_impl.1} parent=52 // pred_region
          // Predicated region
          $region69: #{_actor_forward_impl.1} parent=56 // pred_check
            _
          $region70: #{_actor_forward_impl.1} parent=56 // pred_check_branch
            %584 = sbr.rel (0) target = $region72
          $region71: #{_actor_forward_impl.1} parent=56 // pred_region
            loop: start=0, step=1, limit=1
            $region73: #{_actor_forward_impl.1} parent=71 // loop_pre_header
              _
            $region74: #{_actor_forward_impl.1} parent=71 // loop_header
              %s586 = sphi 0, %s590
              %p587 = scmp.ge.s32.totalorder %s586, 1
              %s591 = sphi [#allocation6], [#allocation6]
              %s592 = sphi %s9, %s9
            $region75: #{_actor_forward_impl.1} parent=71 // loop_header_branch
              %589 = sbr.rel (%p587) target = $region79
            $region76: #{_actor_forward_impl.1} parent=71 // loop_body
              %v593 = vld [vmem:[%s591] sm:$0xff]
              %594 = vst [vmem:[%s592] sm:$0xff] %v593
            $region77: #{_actor_forward_impl.1} parent=71 // loop_footer
              %s590 = sadd.s32 1, %s586
            $region78: #{_actor_forward_impl.1} parent=71 // loop_footer_branch
              %585 = sbr.rel target = $region74
            $region79: #{_actor_forward_impl.1} parent=71 // loop_exit
              _
          $region72: #{_actor_forward_impl.1} parent=56 // pred_fallthru
            _
          // Predicated region
          $region80: #{_actor_forward_impl.1} parent=56 // pred_check
            _
          $region81: #{_actor_forward_impl.1} parent=56 // pred_check_branch
            %596 = sbr.rel target = $region83
          $region82: #{_actor_forward_impl.1} parent=56 // pred_region
            _
          $region83: #{_actor_forward_impl.1} parent=56 // pred_fallthru
            _
        $region57: #{_actor_forward_impl.1} parent=52 // pred_fallthru
          _
        // Predicated region
        $region58: #{_actor_forward_impl.1} parent=52 // pred_check
          _
        $region59: #{_actor_forward_impl.1} parent=52 // pred_check_branch
          %571 = sbr.rel target = $region61
        $region60: #{_actor_forward_impl.1} parent=52 // pred_region
          loop: start=0, step=1, limit=1
          $region62: #{_actor_forward_impl.1} parent=60 // loop_pre_header
            _
          $region63: #{_actor_forward_impl.1} parent=60 // loop_header
            %s574 = sphi 0, %s578
            %p575 = scmp.ge.s32.totalorder %s574, 1
            %s579 = sphi [#allocation6], [#allocation6]
            %s580 = sphi %s9, %s9
          $region64: #{_actor_forward_impl.1} parent=60 // loop_header_branch
            %577 = sbr.rel (%p575) target = $region68
          $region65: #{_actor_forward_impl.1} parent=60 // loop_body
            %v581 = vld [vmem:[%s579] sm:$0xff]
            %582 = vst [vmem:[%s580] sm:$0xff] %v581
          $region66: #{_actor_forward_impl.1} parent=60 // loop_footer
            %s578 = sadd.s32 1, %s574
          $region67: #{_actor_forward_impl.1} parent=60 // loop_footer_branch
            %573 = sbr.rel target = $region63
          $region68: #{_actor_forward_impl.1} parent=60 // loop_exit
            _
        $region61: #{_actor_forward_impl.1} parent=52 // pred_fallthru
          _
      $region53: #{_actor_forward_impl.1} parent=48 // pred_fallthru
        _
      %597 = vnop
    $region49: #{_actor_forward_impl.1} parent=1 // pred_fallthru
      _
    // Predicated region
    $region84: #{_actor_forward_impl.1} parent=1 // pred_check
      _
    $region85: #{_actor_forward_impl.1} parent=1 // pred_check_branch
      %599 = sbr.rel (0) target = $region87
    $region86: #{_actor_forward_impl.1} parent=1 // pred_region
      _
    $region87: #{_actor_forward_impl.1} parent=1 // pred_fallthru
      _
    %600 = vsyncpa [#allocation3], 1
    %601 = vsyncpa [#allocation5], 1

</llo_original>
